<compile_context>
chip_gen: v5e
topology: v5e:2x2
jax: 0.10.0
libtpu: 0.0.40
codegen_flags: <defaults>
</compile_context>

<pallas_src>
import math

import jax
import jax.numpy as jnp
from jax.experimental import pallas as pl
from jax.experimental.pallas import tpu as pltpu

FIRST_HIDDEN_LAYER_SIZE = 100
SECOND_HIDDEN_LAYER_SIZE = 50
NUMBER_OF_CLASSES = 10

_LANE = 128
_SUBLANE = 8
_MAX_BATCH_TILE = 1024   # rows per grid step upper bound
_MIN_SPLIT_TILE = 256    # never split below this many rows per tile
_SMALL_BATCH_XLA = 256   # below this, plain XLA beats a standalone pallas_call
_NEG_INF = -1e30


def _round_up(x, m):
    return (x + m - 1) // m * m


def _pad_to(a, shape, value=0.0):
    pads = [(0, s - d) for d, s in zip(a.shape, shape)]
    if all(p == (0, 0) for p in pads):
        return a
    return jnp.pad(a, pads, constant_values=value)


def mlp_kernel(x_ref, w0_ref, b0_ref, w1_ref, b1_ref, w2_ref, b2_ref, o_ref):
    # x arrives in f32; cast to bf16 in-kernel for the MXU (free on the VPU,
    # avoids a wrapper-side materialized bf16 copy of x).
    x = x_ref[...].astype(jnp.bfloat16)                                # (TB, Dp)
    # fc0 + relu (dropout is identity in eval mode)
    h0 = jnp.dot(x, w0_ref[...], preferred_element_type=jnp.float32) + b0_ref[...]
    h0 = jnp.maximum(h0, 0.0)
    # fc1 + relu
    h1 = jnp.dot(h0.astype(jnp.bfloat16), w1_ref[...],
                 preferred_element_type=jnp.float32) + b1_ref[...]
    h1 = jnp.maximum(h1, 0.0)
    # fc2 (padded class lanes carry -1e30 via the pre-baked bias -> no masking)
    logits = jnp.dot(h1.astype(jnp.bfloat16), w2_ref[...],
                     preferred_element_type=jnp.float32) + b2_ref[...]
    # numerically-stable log_softmax along the class (lane) axis, all in f32
    m = jnp.max(logits, axis=-1, keepdims=True)
    s = logits - m
    lse = jnp.log(jnp.sum(jnp.exp(s), axis=-1, keepdims=True))
    o_ref[...] = s - lse


def prepare_params(params, image_size):
    """One-time padding + bf16 cast of the weights (hoisted out of the forward)."""
    w0, b0, w1, b1, w2, b2 = (params[k] for k in ("w0", "b0", "w1", "b1", "w2", "b2"))

    Dp = _round_up(image_size, _LANE)
    H1p = _round_up(FIRST_HIDDEN_LAYER_SIZE, _LANE)
    H2p = _round_up(SECOND_HIDDEN_LAYER_SIZE, _LANE)
    Cp = _round_up(NUMBER_OF_CLASSES, _LANE)

    # b2 padded lanes get -1e30 so padded logits never contribute to the softmax
    # (padded w2 columns are zero, so the padded logit equals the padded bias).
    b2_row = b2.reshape(1, -1).astype(jnp.float32)
    b2_p = jnp.concatenate(
        [b2_row, jnp.full((1, Cp - NUMBER_OF_CLASSES), _NEG_INF, jnp.float32)],
        axis=1)

    return {
        "image_size": image_size,
        "Dp": Dp, "H1p": H1p, "H2p": H2p, "Cp": Cp,
        "w0": _pad_to(w0, (Dp, H1p)).astype(jnp.bfloat16),
        "b0": _pad_to(b0.reshape(1, -1), (1, H1p)).astype(jnp.float32),
        "w1": _pad_to(w1, (H1p, H2p)).astype(jnp.bfloat16),
        "b1": _pad_to(b1.reshape(1, -1), (1, H2p)).astype(jnp.float32),
        "w2": _pad_to(w2, (H2p, Cp)).astype(jnp.bfloat16),
        "b2": b2_p,
        # unpadded f32 params for the small-batch fused-XLA path
        "raw": {"w0": w0, "b0": b0, "w1": w1, "b1": b1, "w2": w2, "b2": b2},
    }


def _pick_batch_tile(B):
    """Rows per grid step.

    Large tiles amortize the ~0.35us/step pipeline overhead, but for large
    batches we want >=2 grid steps so the "parallel" batch axis can shard
    across v7x's two TensorCores.  Never below _MIN_SPLIT_TILE rows per tile.
    """
    if B < 2 * _MIN_SPLIT_TILE:
        TB = _round_up(max(B, _SUBLANE), _SUBLANE)          # single tile
    else:
        half = _round_up(-(-B // 2), _SUBLANE)
        TB = min(_MAX_BATCH_TILE, max(_MIN_SPLIT_TILE, half))
    Bp = _round_up(B, TB)
    return TB, Bp


def _forward_pallas(xf, prepared):
    """xf: [B, image_size] float32 (already flattened)."""
    Dp, Cp = prepared["Dp"], prepared["Cp"]
    B = xf.shape[0]

    TB, Bp = _pick_batch_tile(B)
    xf_p = _pad_to(xf, (Bp, Dp))                            # f32; no-op if aligned

    w0, b0, w1, b1, w2, b2 = (prepared[k] for k in ("w0", "b0", "w1", "b1", "w2", "b2"))

    grid = (Bp // TB,)

    def resident(a):
        # full-array block, constant index -> DMA'd once, stays resident in VMEM
        return pl.BlockSpec(a.shape, lambda i, n=a.ndim: (0,) * n)

    out = pl.pallas_call(
        mlp_kernel,
        out_shape=jax.ShapeDtypeStruct((Bp, Cp), jnp.float32),
        grid_spec=pl.GridSpec(
            grid=grid,
            in_specs=[
                pl.BlockSpec((TB, Dp), lambda i: (i, 0)),   # x: tiled over batch
                resident(w0), resident(b0),
                resident(w1), resident(b1),
                resident(w2), resident(b2),
            ],
            out_specs=pl.BlockSpec((TB, Cp), lambda i: (i, 0)),
        ),
        compiler_params=pltpu.CompilerParams(
            dimension_semantics=("parallel",),              # 2-TC sharding on v7x
            vmem_limit_bytes=32 << 20,                      # plenty; <=32MiB on all gens
        ),
    )(xf_p, w0, b0, w1, b1, w2, b2)

    return out[:B, :NUMBER_OF_CLASSES]


def _forward_xla(xf, prepared):
    """Small-batch path: plain fused XLA in f32 (no kernel launch / weight DMA)."""
    p = prepared["raw"]
    h = jnp.maximum(xf @ p["w0"] + p["b0"], 0.0)
    h = jnp.maximum(h @ p["w1"] + p["b1"], 0.0)
    logits = h @ p["w2"] + p["b2"]
    return jax.nn.log_softmax(logits, axis=-1)


def second_net_forward(x, prepared, *, force_pallas=False):
    """x: [B, C, H, W] float32.  prepared: output of prepare_params."""
    image_size = prepared["image_size"]
    B = x.shape[0]
    xf = x.reshape(B, -1).astype(jnp.float32)               # x.view(-1, image_size)
    assert xf.shape[1] == image_size

    if not force_pallas and B <= _SMALL_BATCH_XLA:
        # At B ~ 2-256 the whole net is <1MB of weights; a standalone
        # pallas_call is launch/DMA dominated, so stay in fused XLA.
        return _forward_xla(xf, prepared)
    return _forward_pallas(xf, prepared)


def init_params(key, image_size):
    """Deterministic init mirroring torch.nn.Linear (uniform +/- 1/sqrt(fan_in)).

    Weights are stored as [fan_in, fan_out] so the kernel computes x @ W + b,
    equivalent to PyTorch's x @ W.T + b with W of shape [out, in].
    """
    keys = jax.random.split(key, 6)

    def linear(kw, kb, fan_in, fan_out):
        bound = 1.0 / math.sqrt(fan_in)
        w = jax.random.uniform(kw, (fan_in, fan_out), jnp.float32, -bound, bound)
        b = jax.random.uniform(kb, (fan_out,), jnp.float32, -bound, bound)
        return w, b

    w0, b0 = linear(keys[0], keys[1], image_size, FIRST_HIDDEN_LAYER_SIZE)
    w1, b1 = linear(keys[2], keys[3], FIRST_HIDDEN_LAYER_SIZE, SECOND_HIDDEN_LAYER_SIZE)
    w2, b2 = linear(keys[4], keys[5], SECOND_HIDDEN_LAYER_SIZE, NUMBER_OF_CLASSES)
    return {"w0": w0, "b0": b0, "w1": w1, "b1": b1, "w2": w2, "b2": b2}


if __name__ == "__main__":
    key = jax.random.PRNGKey(0)
    k_x, k_p = jax.random.split(key)

    # Small MNIST-like input: batch=2, channels=1, spatial=16x16 -> image_size=256.
    B, C, H, W = 2, 1, 16, 16
    image_size = C * H * W

    x = jax.random.normal(k_x, (B, C, H, W), dtype=jnp.float32)
    params = init_params(k_p, image_size)
    prepared = prepare_params(params, image_size)      # one-time pad + bf16 cast

    # Exercise the Pallas kernel (force past the small-batch XLA dispatch).
    out = second_net_forward(x, prepared, force_pallas=True)
    out = jax.block_until_ready(out)

    assert out.shape == (B, NUMBER_OF_CLASSES)
    # log_softmax rows must (exp-)sum to ~1
    assert bool(jnp.all(jnp.abs(jnp.sum(jnp.exp(out), axis=1) - 1.0) < 1e-4))

    # sanity vs pure-JAX f32 reference (bf16 matmul inputs -> loose tolerance)
    xf = x.reshape(B, -1)
    r = jnp.maximum(xf @ params["w0"] + params["b0"], 0.0)
    r = jnp.maximum(r @ params["w1"] + params["b1"], 0.0)
    r = r @ params["w2"] + params["b2"]
    ref = jax.nn.log_softmax(r, axis=-1)
    assert bool(jnp.all(jnp.abs(out - ref) < 5e-2))

    # the default small-batch fused-XLA path should agree too
    out_xla = jax.block_until_ready(second_net_forward(x, prepared))
    assert bool(jnp.all(jnp.abs(out_xla - ref) < 1e-4))

    print("KERNEL_OK")
</pallas_src>

<mosaic_0001>
module attributes {stable_mosaic.version = 11 : i64} {
  func.func @mlp_kernel(%arg0: i32, %arg1: memref<8x256xf32, #tpu.memory_space<vmem>>, %arg2: memref<256x128xbf16, #tpu.memory_space<vmem>>, %arg3: memref<1x128xf32, #tpu.memory_space<vmem>>, %arg4: memref<128x128xbf16, #tpu.memory_space<vmem>>, %arg5: memref<1x128xf32, #tpu.memory_space<vmem>>, %arg6: memref<128x128xbf16, #tpu.memory_space<vmem>>, %arg7: memref<1x128xf32, #tpu.memory_space<vmem>>, %arg8: memref<8x128xf32, #tpu.memory_space<vmem>>) attributes {dimension_semantics = [#tpu.dimension_semantics<parallel>], iteration_bounds = array<i64: 1>, scalar_prefetch = 0 : i64, scratch_operands = 0 : i64, tpu.core_type = #tpu.core_type<tc>, window_params = [{transform_indices = @transform_0, window_bounds = array<i64: 8, 256>}, {pipeline_mode = #tpu.pipeline_mode<synchronous>, transform_indices = @transform_1, window_bounds = array<i64: 256, 128>}, {pipeline_mode = #tpu.pipeline_mode<synchronous>, transform_indices = @transform_2, window_bounds = array<i64: 1, 128>}, {pipeline_mode = #tpu.pipeline_mode<synchronous>, transform_indices = @transform_3, window_bounds = array<i64: 128, 128>}, {pipeline_mode = #tpu.pipeline_mode<synchronous>, transform_indices = @transform_4, window_bounds = array<i64: 1, 128>}, {pipeline_mode = #tpu.pipeline_mode<synchronous>, transform_indices = @transform_5, window_bounds = array<i64: 128, 128>}, {pipeline_mode = #tpu.pipeline_mode<synchronous>, transform_indices = @transform_6, window_bounds = array<i64: 1, 128>}, {transform_indices = @transform_7, window_bounds = array<i64: 8, 128>}]} {
    %c0 = arith.constant 0 : index
    %c0_0 = arith.constant 0 : index
    %0 = vector.load %arg1[%c0, %c0_0] : memref<8x256xf32, #tpu.memory_space<vmem>>, vector<8x256xf32>
    %1 = arith.truncf %0 : vector<8x256xf32> to vector<8x256xbf16>
    %c0_1 = arith.constant 0 : index
    %c0_2 = arith.constant 0 : index
    %2 = vector.load %arg2[%c0_1, %c0_2] : memref<256x128xbf16, #tpu.memory_space<vmem>>, vector<256x128xbf16>
    %cst = arith.constant dense<0.000000e+00> : vector<8x128xf32>
    %3 = tpu.matmul %1, %2, %cst {dimension_numbers = #tpu.dot_dimension_numbers<[1], [0], [0], [1], [0, 0, 1, 1], [], []>} : vector<8x256xbf16>, vector<256x128xbf16>, vector<8x128xf32> -> vector<8x128xf32>
    %c0_3 = arith.constant 0 : index
    %c0_4 = arith.constant 0 : index
    %4 = vector.load %arg3[%c0_3, %c0_4] : memref<1x128xf32, #tpu.memory_space<vmem>>, vector<1x128xf32>
    %5 = vector.broadcast %4 : vector<1x128xf32> to vector<8x128xf32>
    %6 = arith.addf %3, %5 : vector<8x128xf32>
    %cst_5 = arith.constant 0.000000e+00 : f32
    %7 = vector.broadcast %cst_5 : f32 to vector<8x128xf32>
    %8 = arith.maximumf %6, %7 : vector<8x128xf32>
    %9 = arith.truncf %8 : vector<8x128xf32> to vector<8x128xbf16>
    %c0_6 = arith.constant 0 : index
    %c0_7 = arith.constant 0 : index
    %10 = vector.load %arg4[%c0_6, %c0_7] : memref<128x128xbf16, #tpu.memory_space<vmem>>, vector<128x128xbf16>
    %cst_8 = arith.constant dense<0.000000e+00> : vector<8x128xf32>
    %11 = tpu.matmul %9, %10, %cst_8 {dimension_numbers = #tpu.dot_dimension_numbers<[1], [0], [0], [1], [0, 0, 1, 1], [], []>} : vector<8x128xbf16>, vector<128x128xbf16>, vector<8x128xf32> -> vector<8x128xf32>
    %c0_9 = arith.constant 0 : index
    %c0_10 = arith.constant 0 : index
    %12 = vector.load %arg5[%c0_9, %c0_10] : memref<1x128xf32, #tpu.memory_space<vmem>>, vector<1x128xf32>
    %13 = vector.broadcast %12 : vector<1x128xf32> to vector<8x128xf32>
    %14 = arith.addf %11, %13 : vector<8x128xf32>
    %cst_11 = arith.constant 0.000000e+00 : f32
    %15 = vector.broadcast %cst_11 : f32 to vector<8x128xf32>
    %16 = arith.maximumf %14, %15 : vector<8x128xf32>
    %17 = arith.truncf %16 : vector<8x128xf32> to vector<8x128xbf16>
    %c0_12 = arith.constant 0 : index
    %c0_13 = arith.constant 0 : index
    %18 = vector.load %arg6[%c0_12, %c0_13] : memref<128x128xbf16, #tpu.memory_space<vmem>>, vector<128x128xbf16>
    %cst_14 = arith.constant dense<0.000000e+00> : vector<8x128xf32>
    %19 = tpu.matmul %17, %18, %cst_14 {dimension_numbers = #tpu.dot_dimension_numbers<[1], [0], [0], [1], [0, 0, 1, 1], [], []>} : vector<8x128xbf16>, vector<128x128xbf16>, vector<8x128xf32> -> vector<8x128xf32>
    %c0_15 = arith.constant 0 : index
    %c0_16 = arith.constant 0 : index
    %20 = vector.load %arg7[%c0_15, %c0_16] : memref<1x128xf32, #tpu.memory_space<vmem>>, vector<1x128xf32>
    %21 = vector.broadcast %20 : vector<1x128xf32> to vector<8x128xf32>
    %22 = arith.addf %19, %21 : vector<8x128xf32>
    %cst_17 = arith.constant dense<0xFF800000> : vector<8xf32>
    %23 = vector.multi_reduction <maximumf>, %22, %cst_17 [1] : vector<8x128xf32> to vector<8xf32>
    %24 = vector.shape_cast %23 : vector<8xf32> to vector<8x1xf32>
    %25 = vector.broadcast %24 : vector<8x1xf32> to vector<8x128xf32>
    %26 = arith.subf %22, %25 : vector<8x128xf32>
    %27 = math.exp %26 : vector<8x128xf32>
    %cst_18 = arith.constant dense<0.000000e+00> : vector<8xf32>
    %28 = vector.multi_reduction <add>, %27, %cst_18 [1] : vector<8x128xf32> to vector<8xf32>
    %29 = vector.shape_cast %28 : vector<8xf32> to vector<8x1xf32>
    %30 = math.log %29 : vector<8x1xf32>
    %31 = vector.broadcast %30 : vector<8x1xf32> to vector<8x128xf32>
    %32 = arith.subf %26, %31 : vector<8x128xf32>
    %c0_19 = arith.constant 0 : index
    %c0_20 = arith.constant 0 : index
    %33 = vector.load %arg8[%c0_19, %c0_20] : memref<8x128xf32, #tpu.memory_space<vmem>>, vector<8x128xf32>
    tpu.vector_store %arg8[%c0_19, %c0_20], %32 {strides = array<i32>} : memref<8x128xf32, #tpu.memory_space<vmem>>, vector<8x128xf32>,
    return
  }
  func.func @transform_0(%arg0: i32) -> (i32, i32) {
    %c0_i32 = arith.constant 0 : i32
    %c0_i32_0 = arith.constant 0 : i32
    return %arg0, %c0_i32 : i32, i32
  }
  func.func @transform_1(%arg0: i32) -> (i32, i32) {
    %c0_i32 = arith.constant 0 : i32
    %c0_i32_0 = arith.constant 0 : i32
    %c0_i32_1 = arith.constant 0 : i32
    return %c0_i32, %c0_i32_0 : i32, i32
  }
  func.func @transform_2(%arg0: i32) -> (i32, i32) {
    %c0_i32 = arith.constant 0 : i32
    %c0_i32_0 = arith.constant 0 : i32
    %c0_i32_1 = arith.constant 0 : i32
    return %c0_i32, %c0_i32_0 : i32, i32
  }
  func.func @transform_3(%arg0: i32) -> (i32, i32) {
    %c0_i32 = arith.constant 0 : i32
    %c0_i32_0 = arith.constant 0 : i32
    %c0_i32_1 = arith.constant 0 : i32
    return %c0_i32, %c0_i32_0 : i32, i32
  }
  func.func @transform_4(%arg0: i32) -> (i32, i32) {
    %c0_i32 = arith.constant 0 : i32
    %c0_i32_0 = arith.constant 0 : i32
    %c0_i32_1 = arith.constant 0 : i32
    return %c0_i32, %c0_i32_0 : i32, i32
  }
  func.func @transform_5(%arg0: i32) -> (i32, i32) {
    %c0_i32 = arith.constant 0 : i32
    %c0_i32_0 = arith.constant 0 : i32
    %c0_i32_1 = arith.constant 0 : i32
    return %c0_i32, %c0_i32_0 : i32, i32
  }
  func.func @transform_6(%arg0: i32) -> (i32, i32) {
    %c0_i32 = arith.constant 0 : i32
    %c0_i32_0 = arith.constant 0 : i32
    %c0_i32_1 = arith.constant 0 : i32
    return %c0_i32, %c0_i32_0 : i32, i32
  }
  func.func @transform_7(%arg0: i32) -> (i32, i32) {
    %c0_i32 = arith.constant 0 : i32
    %c0_i32_0 = arith.constant 0 : i32
    return %arg0, %c0_i32 : i32, i32
  }
}

</mosaic_0001>

<llo_original>
// kernel: tpu_custom_call.1
$region0: #{tpu_custom_call.1}
  #allocation0 [shape = 'u32[]', space=smem, size = 0x4, offset = 0x4, fixed_abs, tag = 'smem constant byte address 0x4 - core index']
  #allocation1 [shape = 'u32[72,128]{1,0:T(1,128)}', space=vmem, size = 0x9000, scoped, tag = 'internal scratch']
  %s0 = inlined_call_operand.hbm [shape: f32[8,256], index: 0, kind: input, shape index: {}]
  %s1 = inlined_call_operand.hbm [shape: bf16[256,128], index: 1, kind: input, shape index: {}]
  %s2 = inlined_call_operand.vmem [shape: f32[1,128], index: 2, kind: input, shape index: {}]
  %s3 = inlined_call_operand.hbm [shape: bf16[128,128], index: 3, kind: input, shape index: {}]
  %s4 = inlined_call_operand.vmem [shape: f32[1,128], index: 4, kind: input, shape index: {}]
  %s5 = inlined_call_operand.hbm [shape: bf16[128,128], index: 5, kind: input, shape index: {}]
  %s6 = inlined_call_operand.vmem [shape: f32[1,128], index: 6, kind: input, shape index: {}]
  %s7 = inlined_call_operand.hbm [shape: f32[8,128], index: 7, kind: output, shape index: {}]
  %s8 = sld [smem:[#allocation0]]
  $region54: #{tpu_custom_call.1} parent=0
    _
  %s10 = ssub.s32 1, %s8
  %s11 = scalar_select 0, %s10, %s8
  $region1: #{tpu_custom_call.1} parent=0
    #allocation2 [shape = 'u8[8192]{0}', space=vmem, size = 0x2000, scoped, tag = 'input window, operand 0, single buffered']
    #allocation3 [shape = 's32[1]{0}', space=sflag, size = 0x4, scoped, tag = 'scoped memory for tpu_custom_call.1']
    #allocation4 [shape = 's32[1]{0}', space=sflag, size = 0x4, scoped, tag = 'scoped memory for tpu_custom_call.1']
    #allocation5 [shape = 'u8[65536]{0}', space=vmem, size = 0x10000, scoped, tag = 'input window, operand 1, single buffered']
    #allocation6 [shape = 's32[1]{0}', space=sflag, size = 0x4, scoped, tag = 'scoped memory for tpu_custom_call.1']
    #allocation7 [shape = 'u8[32768]{0}', space=vmem, size = 0x8000, scoped, tag = 'input window, operand 3, single buffered']
    #allocation8 [shape = 'u8[32768]{0}', space=vmem, size = 0x8000, scoped, tag = 'input window, operand 5, single buffered']
    #allocation9 [shape = 's32[1]{0}', space=sflag, size = 0x4, scoped, tag = 'scoped memory for tpu_custom_call.1']
    #allocation10 [shape = 'u8[4096]{0}', space=vmem, size = 0x1000, scoped, tag = 'output window, operand 0, single buffered']
    %12 = vsyncpa [#allocation3], 0
    %13 = vsyncpa [#allocation6], 0
    %14 = vsyncpa [#allocation9], 0
    %15 = vsyncpa [#allocation4], 0
    // Predicated region
    $region2: #{tpu_custom_call.1} parent=1 // pred_check
      _
    $region3: #{tpu_custom_call.1} parent=1 // pred_check_branch
      %17 = sbr.rel (0) target = $region5
    $region4: #{tpu_custom_call.1} parent=1 // pred_region
      %19 = vsyncadd [#allocation3], 0
      %s21 = sshll.u32 %s0, 4
      %s22 = int_to_ptr.hbm [resolvable:$true] %s21
      %s23 = sshll.u32 [#allocation2], 4
      %s24 = int_to_ptr.vmem [resolvable:$true] %s23
      %26 = dma.hbm_to_vmem [thread:$0]  %s22, 256, %s24, [#allocation3]
    $region5: #{tpu_custom_call.1} parent=1 // pred_fallthru
      _
    // Predicated region
    $region6: #{tpu_custom_call.1} parent=1 // pred_check
      _
    $region7: #{tpu_custom_call.1} parent=1 // pred_check_branch
      %28 = sbr.rel (0) target = $region9
    $region8: #{tpu_custom_call.1} parent=1 // pred_region
      %30 = vsyncadd [#allocation6], 0
      %s31 = sshll.u32 %s1, 4
      %s32 = int_to_ptr.hbm [resolvable:$true] %s31
      %s33 = sshll.u32 [#allocation5], 4
      %s34 = int_to_ptr.vmem [resolvable:$true] %s33
      %39 = dma.hbm_to_vmem [thread:$0]  %s32, 2048, %s34, [#allocation6], 64, 64, 4
    $region9: #{tpu_custom_call.1} parent=1 // pred_fallthru
      _
    // Predicated region
    $region10: #{tpu_custom_call.1} parent=1 // pred_check
      _
    $region11: #{tpu_custom_call.1} parent=1 // pred_check_branch
      %41 = sbr.rel (0) target = $region13
    $region12: #{tpu_custom_call.1} parent=1 // pred_region
      _
    $region13: #{tpu_custom_call.1} parent=1 // pred_fallthru
      _
    // Predicated region
    $region14: #{tpu_custom_call.1} parent=1 // pred_check
      _
    $region15: #{tpu_custom_call.1} parent=1 // pred_check_branch
      %43 = sbr.rel (0) target = $region17
    $region16: #{tpu_custom_call.1} parent=1 // pred_region
      %45 = vsyncadd [#allocation6], 0
      %s46 = sshll.u32 %s3, 4
      %s47 = int_to_ptr.hbm [resolvable:$true] %s46
      %s48 = sshll.u32 [#allocation7], 4
      %s49 = int_to_ptr.vmem [resolvable:$true] %s48
      %54 = dma.hbm_to_vmem [thread:$0]  %s47, 1024, %s49, [#allocation6], 64, 64, 4
    $region17: #{tpu_custom_call.1} parent=1 // pred_fallthru
      _
    // Predicated region
    $region18: #{tpu_custom_call.1} parent=1 // pred_check
      _
    $region19: #{tpu_custom_call.1} parent=1 // pred_check_branch
      %56 = sbr.rel (0) target = $region21
    $region20: #{tpu_custom_call.1} parent=1 // pred_region
      _
    $region21: #{tpu_custom_call.1} parent=1 // pred_fallthru
      _
    // Predicated region
    $region22: #{tpu_custom_call.1} parent=1 // pred_check
      _
    $region23: #{tpu_custom_call.1} parent=1 // pred_check_branch
      %58 = sbr.rel (0) target = $region25
    $region24: #{tpu_custom_call.1} parent=1 // pred_region
      %60 = vsyncadd [#allocation9], 0
      %s61 = sshll.u32 %s5, 4
      %s62 = int_to_ptr.hbm [resolvable:$true] %s61
      %s63 = sshll.u32 [#allocation8], 4
      %s64 = int_to_ptr.vmem [resolvable:$true] %s63
      %69 = dma.hbm_to_vmem [thread:$0]  %s62, 1024, %s64, [#allocation9], 64, 64, 4
    $region25: #{tpu_custom_call.1} parent=1 // pred_fallthru
      _
    // Predicated region
    $region26: #{tpu_custom_call.1} parent=1 // pred_check
      _
    $region27: #{tpu_custom_call.1} parent=1 // pred_check_branch
      %71 = sbr.rel (0) target = $region29
    $region28: #{tpu_custom_call.1} parent=1 // pred_region
      _
    $region29: #{tpu_custom_call.1} parent=1 // pred_fallthru
      _
    // Predicated region
    $region30: #{tpu_custom_call.1} parent=1 // pred_check
      _
    $region31: #{tpu_custom_call.1} parent=1 // pred_check_branch
      %73 = sbr.rel (0) target = $region33
    $region32: #{tpu_custom_call.1} parent=1 // pred_region
      %75 = dma.done [#allocation3], 256
    $region33: #{tpu_custom_call.1} parent=1 // pred_fallthru
      _
    // Predicated region
    $region34: #{tpu_custom_call.1} parent=1 // pred_check
      _
    $region35: #{tpu_custom_call.1} parent=1 // pred_check_branch
      %77 = sbr.rel (0) target = $region37
    $region36: #{tpu_custom_call.1} parent=1 // pred_region
      %79 = dma.done [#allocation6], 2048
    $region37: #{tpu_custom_call.1} parent=1 // pred_fallthru
      _
    // Predicated region
    $region38: #{tpu_custom_call.1} parent=1 // pred_check
      _
    $region39: #{tpu_custom_call.1} parent=1 // pred_check_branch
      %81 = sbr.rel (0) target = $region41
    $region40: #{tpu_custom_call.1} parent=1 // pred_region
      %83 = dma.done [#allocation6], 1024
    $region41: #{tpu_custom_call.1} parent=1 // pred_fallthru
      _
    // Predicated region
    $region42: #{tpu_custom_call.1} parent=1 // pred_check
      _
    $region43: #{tpu_custom_call.1} parent=1 // pred_check_branch
      %85 = sbr.rel (0) target = $region45
    $region44: #{tpu_custom_call.1} parent=1 // pred_region
      %87 = dma.done [#allocation9], 1024
    $region45: #{tpu_custom_call.1} parent=1 // pred_fallthru
      _
    %v88 = vld [vmem:[#allocation2] sm:$0xff]
    %v89 = vld [vmem:[#allocation2 + $0x8] sm:$0xff]
    %v90 = vpack.c.bf16 %v88, %v88
    %v91 = vpack.c.bf16 %v89, %v89
    %v92 = vld [vmem:[#allocation5] sm:$0xf]
    %v93 = vld [vmem:[#allocation5 + $0x4] sm:$0xf]
    %v94 = vld [vmem:[#allocation5 + $0x8] sm:$0xf]
    %v95 = vld [vmem:[#allocation5 + $0xc] sm:$0xf]
    %v96 = vld [vmem:[#allocation5 + $0x10] sm:$0xf]
    %v97 = vld [vmem:[#allocation5 + $0x14] sm:$0xf]
    %v98 = vld [vmem:[#allocation5 + $0x18] sm:$0xf]
    %v99 = vld [vmem:[#allocation5 + $0x1c] sm:$0xf]
    %v100 = vld [vmem:[#allocation5 + $0x20] sm:$0xf]
    %v101 = vld [vmem:[#allocation5 + $0x24] sm:$0xf]
    %v102 = vld [vmem:[#allocation5 + $0x28] sm:$0xf]
    %v103 = vld [vmem:[#allocation5 + $0x2c] sm:$0xf]
    %v104 = vld [vmem:[#allocation5 + $0x30] sm:$0xf]
    %v105 = vld [vmem:[#allocation5 + $0x34] sm:$0xf]
    %v106 = vld [vmem:[#allocation5 + $0x38] sm:$0xf]
    %v107 = vld [vmem:[#allocation5 + $0x3c] sm:$0xf]
    %v108 = vld [vmem:[#allocation5 + $0x40] sm:$0xf]
    %v109 = vld [vmem:[#allocation5 + $0x44] sm:$0xf]
    %v110 = vld [vmem:[#allocation5 + $0x48] sm:$0xf]
    %v111 = vld [vmem:[#allocation5 + $0x4c] sm:$0xf]
    %v112 = vld [vmem:[#allocation5 + $0x50] sm:$0xf]
    %v113 = vld [vmem:[#allocation5 + $0x54] sm:$0xf]
    %v114 = vld [vmem:[#allocation5 + $0x58] sm:$0xf]
    %v115 = vld [vmem:[#allocation5 + $0x5c] sm:$0xf]
    %v116 = vld [vmem:[#allocation5 + $0x60] sm:$0xf]
    %v117 = vld [vmem:[#allocation5 + $0x64] sm:$0xf]
    %v118 = vld [vmem:[#allocation5 + $0x68] sm:$0xf]
    %v119 = vld [vmem:[#allocation5 + $0x6c] sm:$0xf]
    %v120 = vld [vmem:[#allocation5 + $0x70] sm:$0xf]
    %v121 = vld [vmem:[#allocation5 + $0x74] sm:$0xf]
    %v122 = vld [vmem:[#allocation5 + $0x78] sm:$0xf]
    %v123 = vld [vmem:[#allocation5 + $0x7c] sm:$0xf]
    %v124 = vld [vmem:[%s2] sm:$0x1]
    %v126 = vperm.slane %v124, 0
    %v160 = vunpack.c.l.b16 %v92
    %v161 = vunpack.c.l.b16 %v93
    %v162 = vunpack.c.l.b16 %v94
    %v163 = vunpack.c.l.b16 %v95
    %v164 = vunpack.c.l.b16 %v96
    %v165 = vunpack.c.l.b16 %v97
    %v166 = vunpack.c.l.b16 %v98
    %v167 = vunpack.c.l.b16 %v99
    %v168 = vunpack.c.l.b16 %v100
    %v169 = vunpack.c.l.b16 %v101
    %v170 = vunpack.c.l.b16 %v102
    %v171 = vunpack.c.l.b16 %v103
    %v172 = vunpack.c.l.b16 %v104
    %v173 = vunpack.c.l.b16 %v105
    %v174 = vunpack.c.l.b16 %v106
    %v175 = vunpack.c.l.b16 %v107
    %v176 = vunpack.c.l.b16 %v108
    %v177 = vunpack.c.l.b16 %v109
    %v178 = vunpack.c.l.b16 %v110
    %v179 = vunpack.c.l.b16 %v111
    %v180 = vunpack.c.l.b16 %v112
    %v181 = vunpack.c.l.b16 %v113
    %v182 = vunpack.c.l.b16 %v114
    %v183 = vunpack.c.l.b16 %v115
    %v184 = vunpack.c.l.b16 %v116
    %v185 = vunpack.c.l.b16 %v117
    %v186 = vunpack.c.l.b16 %v118
    %v187 = vunpack.c.l.b16 %v119
    %v188 = vunpack.c.l.b16 %v120
    %v189 = vunpack.c.l.b16 %v121
    %v190 = vunpack.c.l.b16 %v122
    %v191 = vunpack.c.l.b16 %v123
    %v192 = vpack.c.b16 %v161, %v160
    %v193 = vpack.c.b16 %v163, %v162
    %v194 = vpack.c.b16 %v165, %v164
    %v195 = vpack.c.b16 %v167, %v166
    %v196 = vpack.c.b16 %v169, %v168
    %v197 = vpack.c.b16 %v171, %v170
    %v198 = vpack.c.b16 %v173, %v172
    %v199 = vpack.c.b16 %v175, %v174
    %v200 = vpack.c.b16 %v177, %v176
    %v201 = vpack.c.b16 %v179, %v178
    %v202 = vpack.c.b16 %v181, %v180
    %v203 = vpack.c.b16 %v183, %v182
    %v204 = vpack.c.b16 %v185, %v184
    %v205 = vpack.c.b16 %v187, %v186
    %v206 = vpack.c.b16 %v189, %v188
    %v207 = vpack.c.b16 %v191, %v190
    %224 = vmatpush.bf16.msra.mxu0 %v199
    %225 = vmatpush.bf16.msra.mxu0 %v198
    %226 = vmatpush.bf16.msra.mxu0 %v197
    %227 = vmatpush.bf16.msra.mxu0 %v196
    %228 = vmatpush.bf16.msra.mxu0 %v195
    %229 = vmatpush.bf16.msra.mxu0 %v194
    %230 = vmatpush.bf16.msra.mxu0 %v193
    %231 = vmatpush.bf16.msra.mxu0 %v192
    %232 = vmatmul.bf16.gmra.mxu0 %v90
    %v233 = vpop.f32.mrf.mxu0
    %v234 = vadd.f32 %v126, %v233
    %v235 = vpop.f32.mrf.mxu0
    %236 = vdwg.mxu0
    %237 = vmatpush.bf16.msra.mxu0 %v207
    %238 = vmatpush.bf16.msra.mxu0 %v206
    %239 = vmatpush.bf16.msra.mxu0 %v205
    %240 = vmatpush.bf16.msra.mxu0 %v204
    %241 = vmatpush.bf16.msra.mxu0 %v203
    %242 = vmatpush.bf16.msra.mxu0 %v202
    %243 = vmatpush.bf16.msra.mxu0 %v201
    %244 = vmatpush.bf16.msra.mxu0 %v200
    %245 = vmatmul.bf16.gmra.mxu0 %v91
    %v246 = vpop.f32.mrf.mxu0
    %v247 = vadd.f32 %v234, %v246
    %v248 = vpop.f32.mrf.mxu0
    %249 = vdwg.mxu0
    %v250 = vmax.f32 %v247, 0.0
    %v251 = vpack.c.bf16 %v250, %v250
    %v252 = vld [vmem:[#allocation7] sm:$0xf]
    %v253 = vld [vmem:[#allocation7 + $0x4] sm:$0xf]
    %v254 = vld [vmem:[#allocation7 + $0x8] sm:$0xf]
    %v255 = vld [vmem:[#allocation7 + $0xc] sm:$0xf]
    %v256 = vld [vmem:[#allocation7 + $0x10] sm:$0xf]
    %v257 = vld [vmem:[#allocation7 + $0x14] sm:$0xf]
    %v258 = vld [vmem:[#allocation7 + $0x18] sm:$0xf]
    %v259 = vld [vmem:[#allocation7 + $0x1c] sm:$0xf]
    %v260 = vld [vmem:[#allocation7 + $0x20] sm:$0xf]
    %v261 = vld [vmem:[#allocation7 + $0x24] sm:$0xf]
    %v262 = vld [vmem:[#allocation7 + $0x28] sm:$0xf]
    %v263 = vld [vmem:[#allocation7 + $0x2c] sm:$0xf]
    %v264 = vld [vmem:[#allocation7 + $0x30] sm:$0xf]
    %v265 = vld [vmem:[#allocation7 + $0x34] sm:$0xf]
    %v266 = vld [vmem:[#allocation7 + $0x38] sm:$0xf]
    %v267 = vld [vmem:[#allocation7 + $0x3c] sm:$0xf]
    %v268 = vld [vmem:[%s4] sm:$0x1]
    %v270 = vperm.slane %v268, 0
    %v288 = vunpack.c.l.b16 %v252
    %v289 = vunpack.c.l.b16 %v253
    %v290 = vunpack.c.l.b16 %v254
    %v291 = vunpack.c.l.b16 %v255
    %v292 = vunpack.c.l.b16 %v256
    %v293 = vunpack.c.l.b16 %v257
    %v294 = vunpack.c.l.b16 %v258
    %v295 = vunpack.c.l.b16 %v259
    %v296 = vunpack.c.l.b16 %v260
    %v297 = vunpack.c.l.b16 %v261
    %v298 = vunpack.c.l.b16 %v262
    %v299 = vunpack.c.l.b16 %v263
    %v300 = vunpack.c.l.b16 %v264
    %v301 = vunpack.c.l.b16 %v265
    %v302 = vunpack.c.l.b16 %v266
    %v303 = vunpack.c.l.b16 %v267
    %v304 = vpack.c.b16 %v289, %v288
    %v305 = vpack.c.b16 %v291, %v290
    %v306 = vpack.c.b16 %v293, %v292
    %v307 = vpack.c.b16 %v295, %v294
    %v308 = vpack.c.b16 %v297, %v296
    %v309 = vpack.c.b16 %v299, %v298
    %v310 = vpack.c.b16 %v301, %v300
    %v311 = vpack.c.b16 %v303, %v302
    %320 = vmatpush.bf16.msra.mxu0 %v311
    %321 = vmatpush.bf16.msra.mxu0 %v310
    %322 = vmatpush.bf16.msra.mxu0 %v309
    %323 = vmatpush.bf16.msra.mxu0 %v308
    %324 = vmatpush.bf16.msra.mxu0 %v307
    %325 = vmatpush.bf16.msra.mxu0 %v306
    %326 = vmatpush.bf16.msra.mxu0 %v305
    %327 = vmatpush.bf16.msra.mxu0 %v304
    %328 = vmatmul.bf16.gmra.mxu0 %v251
    %v329 = vpop.f32.mrf.mxu0
    %v330 = vadd.f32 %v270, %v329
    %v331 = vpop.f32.mrf.mxu0
    %332 = vdwg.mxu0
    %v333 = vmax.f32 %v330, 0.0
    %v334 = vpack.c.bf16 %v333, %v333
    %v335 = vld [vmem:[#allocation8] sm:$0xf]
    %v336 = vld [vmem:[#allocation8 + $0x4] sm:$0xf]
    %v337 = vld [vmem:[#allocation8 + $0x8] sm:$0xf]
    %v338 = vld [vmem:[#allocation8 + $0xc] sm:$0xf]
    %v339 = vld [vmem:[#allocation8 + $0x10] sm:$0xf]
    %v340 = vld [vmem:[#allocation8 + $0x14] sm:$0xf]
    %v341 = vld [vmem:[#allocation8 + $0x18] sm:$0xf]
    %v342 = vld [vmem:[#allocation8 + $0x1c] sm:$0xf]
    %v343 = vld [vmem:[#allocation8 + $0x20] sm:$0xf]
    %v344 = vld [vmem:[#allocation8 + $0x24] sm:$0xf]
    %v345 = vld [vmem:[#allocation8 + $0x28] sm:$0xf]
    %v346 = vld [vmem:[#allocation8 + $0x2c] sm:$0xf]
    %v347 = vld [vmem:[#allocation8 + $0x30] sm:$0xf]
    %v348 = vld [vmem:[#allocation8 + $0x34] sm:$0xf]
    %v349 = vld [vmem:[#allocation8 + $0x38] sm:$0xf]
    %v350 = vld [vmem:[#allocation8 + $0x3c] sm:$0xf]
    %v351 = vld [vmem:[%s6] sm:$0x1]
    %v353 = vperm.slane %v351, 0
    %v371 = vunpack.c.l.b16 %v335
    %v372 = vunpack.c.l.b16 %v336
    %v373 = vunpack.c.l.b16 %v337
    %v374 = vunpack.c.l.b16 %v338
    %v375 = vunpack.c.l.b16 %v339
    %v376 = vunpack.c.l.b16 %v340
    %v377 = vunpack.c.l.b16 %v341
    %v378 = vunpack.c.l.b16 %v342
    %v379 = vunpack.c.l.b16 %v343
    %v380 = vunpack.c.l.b16 %v344
    %v381 = vunpack.c.l.b16 %v345
    %v382 = vunpack.c.l.b16 %v346
    %v383 = vunpack.c.l.b16 %v347
    %v384 = vunpack.c.l.b16 %v348
    %v385 = vunpack.c.l.b16 %v349
    %v386 = vunpack.c.l.b16 %v350
    %v387 = vpack.c.b16 %v372, %v371
    %v388 = vpack.c.b16 %v374, %v373
    %v389 = vpack.c.b16 %v376, %v375
    %v390 = vpack.c.b16 %v378, %v377
    %v391 = vpack.c.b16 %v380, %v379
    %v392 = vpack.c.b16 %v382, %v381
    %v393 = vpack.c.b16 %v384, %v383
    %v394 = vpack.c.b16 %v386, %v385
    %403 = vmatpush.bf16.msra.mxu0 %v394
    %404 = vmatpush.bf16.msra.mxu0 %v393
    %405 = vmatpush.bf16.msra.mxu0 %v392
    %406 = vmatpush.bf16.msra.mxu0 %v391
    %407 = vmatpush.bf16.msra.mxu0 %v390
    %408 = vmatpush.bf16.msra.mxu0 %v389
    %409 = vmatpush.bf16.msra.mxu0 %v388
    %410 = vmatpush.bf16.msra.mxu0 %v387
    %411 = vmatmul.bf16.gmra.mxu0 %v334
    %v412 = vpop.f32.mrf.mxu0
    %v413 = vadd.f32 %v353, %v412
    %v414 = vpop.f32.mrf.mxu0
    %415 = vdwg.mxu0
    %416 = vmax.xlane.f32.xlu0 %v413
    %v417 = vpop.xlane.xlu0 %416
    %v418 = vsub.f32 %v413, %v417
    %v419 = vmul.f32 %v418, 1.442695
    %v420 = vpow.pop %v419
    %421 = vadd.xlane.f32.xlu0 %v420
    %v422 = vpop.xlane.xlu0 %421
    %v423 = vlog2.pop %v422
    %v424 = vmul.f32 %v423, 0.6931472
    %v425 = vsub.f32 %v418, %v424
    %426 = vst [vmem:[#allocation10] sm:$0xff] %v425
    // Predicated region
    $region46: #{tpu_custom_call.1} parent=1 // pred_check
      _
    $region47: #{tpu_custom_call.1} parent=1 // pred_check_branch
      %428 = sbr.rel (0) target = $region49
    $region48: #{tpu_custom_call.1} parent=1 // pred_region
      %430 = vsyncadd [#allocation4], 0
      %s432 = sshll.u32 [#allocation10], 4
      %s433 = int_to_ptr.vmem [resolvable:$true] %s432
      %s434 = sshll.u32 %s7, 4
      %s435 = int_to_ptr.hbm [resolvable:$true] %s434
      %437 = dma.vmem_to_hbm [thread:$0]  %s433, 128, %s435, [#allocation4]
    $region49: #{tpu_custom_call.1} parent=1 // pred_fallthru
      _
    // Predicated region
    $region50: #{tpu_custom_call.1} parent=1 // pred_check
      _
    $region51: #{tpu_custom_call.1} parent=1 // pred_check_branch
      %439 = sbr.rel (0) target = $region53
    $region52: #{tpu_custom_call.1} parent=1 // pred_region
      %441 = dma.done [#allocation4], 128
    $region53: #{tpu_custom_call.1} parent=1 // pred_fallthru
      _
    %442 = vsyncpa [#allocation3], 1
    %443 = vsyncpa [#allocation6], 1
    %444 = vsyncpa [#allocation9], 1
    %445 = vsyncpa [#allocation4], 1

</llo_original>
